<compile_context>
chip_gen: v7x
topology: tpu7x:2x2x1
jax: 0.10.0
libtpu: 0.0.40
codegen_flags: <defaults>
</compile_context>

<pallas_src>
import functools

import jax
import jax.numpy as jnp
from jax.experimental import pallas as pl
from jax.experimental.pallas import tpu as pltpu


def _int_pow(x, n):
    """x**n for a small non-negative integer n as a VPU multiply chain."""
    if n == 0:
        return jnp.ones_like(x)
    result = None
    base = x
    while n > 0:
        if n & 1:
            result = base if result is None else result * base
        n >>= 1
        if n:
            base = base * base
    return result


def _focal_loss_kernel(logits_ref, target_ref, out_ref, *, gamma, hw, tl):
    s = pl.program_id(1)                               # spatial tile index

    x = logits_ref[...].astype(jnp.float32)            # (1, C, TL)
    t = target_ref[...]                                 # (1, 1, TL) int32

    # Per-position log-softmax statistics over the class (sublane) axis.
    m = jnp.max(x, axis=1, keepdims=True)                         # (1, 1, TL)
    sum_exp = jnp.sum(jnp.exp(x - m), axis=1, keepdims=True)      # (1, 1, TL)
    lse = jnp.log(sum_exp)

    # Gather the target-class logit via a one-hot mask over the class axis.
    cls = jax.lax.broadcasted_iota(jnp.int32, x.shape, dimension=1)
    x_t = jnp.sum(jnp.where(cls == t, x, 0.0), axis=1, keepdims=True)

    logp_t = x_t - m - lse                               # log p_target
    one_minus_p = 1.0 - jnp.exp(logp_t)                  # (1 - p_target)

    if float(gamma).is_integer() and gamma >= 0:
        focal_w = _int_pow(one_minus_p, int(gamma))      # multiply chain (VPU)
    else:
        focal_w = jnp.power(one_minus_p, jnp.float32(gamma))

    loss = -(focal_w * logp_t)                           # (1, 1, TL)

    if hw % tl != 0:
        # Mask out padded spatial positions of the last (partial) tile.
        col = s * tl + jax.lax.broadcasted_iota(jnp.int32, loss.shape, 2)
        loss = jnp.where(col < hw, loss, 0.0)

    @pl.when(s == 0)
    def _():
        out_ref[...] = jnp.zeros_like(out_ref)

    out_ref[...] += loss


def _choose_spatial_tile(hw, c, itemsize, target_block_bytes=4 << 20):
    """Largest lane-aligned spatial tile keeping a logits block <= ~4 MiB."""
    if hw < 128:
        return hw                                # full (short) spatial dim
    max_lanes = max(128, (target_block_bytes // (c * itemsize)) // 128 * 128)
    return min(max_lanes, (hw // 128) * 128)


def focal_loss(logits_nchw, target_nhw, *, gamma=5.0, tl=None):
    """FocalLoss forward. logits: (N, C, H, W) float; target: (N, H, W) int."""
    N, C, H, W = logits_nchw.shape
    HW = H * W

    # Free reshapes (no transpose): class stays on dim 1, spatial collapses.
    logits = logits_nchw.reshape(N, C, HW)
    targets = target_nhw.reshape(N, 1, HW).astype(jnp.int32)

    if tl is None:
        tl = _choose_spatial_tile(HW, C, jnp.dtype(logits.dtype).itemsize)
    num_s = pl.cdiv(HW, tl)

    kernel = functools.partial(_focal_loss_kernel, gamma=float(gamma),
                               hw=HW, tl=tl)

    partials = pl.pallas_call(
        kernel,
        out_shape=jax.ShapeDtypeStruct((N, 1, tl), jnp.float32),
        grid_spec=pltpu.PrefetchScalarGridSpec(
            num_scalar_prefetch=0,
            grid=(N, num_s),
            in_specs=[
                pl.BlockSpec((1, C, tl), lambda n, s: (n, 0, s)),
                pl.BlockSpec((1, 1, tl), lambda n, s: (n, 0, s)),
            ],
            out_specs=pl.BlockSpec((1, 1, tl), lambda n, s: (n, 0, 0)),
        ),
        compiler_params=pltpu.CompilerParams(
            dimension_semantics=("parallel", "arbitrary")),
    )(logits, targets)

    # reduction='mean' with weight=None -> divide by total element count.
    return jnp.sum(partials) / jnp.float32(N * HW)


def _focal_loss_ref(logits_nchw, target_nhw, gamma=5.0):
    # Pure-JAX reference matching the PyTorch module semantics.
    N, C, H, W = logits_nchw.shape
    x = jnp.transpose(logits_nchw, (0, 2, 3, 1)).reshape(-1, C).astype(jnp.float32)
    t = target_nhw.reshape(-1)
    log_prob = jax.nn.log_softmax(x, axis=1)
    prob = jnp.exp(log_prob)
    focal = jnp.power(1.0 - prob, gamma) * log_prob
    picked = jnp.take_along_axis(focal, t[:, None], axis=1)[:, 0]
    return -jnp.mean(picked)


if __name__ == "__main__":
    key = jax.random.PRNGKey(0)
    k1, k2, k3, k4 = jax.random.split(key, 4)

    # Primary shape implied by the module (NCHW logits + integer label map).
    N, C, H, W = 2, 4, 16, 16
    logits = jax.random.normal(k1, (N, C, H, W), dtype=jnp.float32)
    target = jax.random.randint(k2, (N, H, W), 0, C, dtype=jnp.int32)

    loss = jax.block_until_ready(focal_loss(logits, target, gamma=5.0))
    ref = _focal_loss_ref(logits, target, gamma=5.0)
    assert jnp.allclose(loss, ref, rtol=1e-4, atol=1e-6), (loss, ref)

    # Non-lane-aligned spatial extent exercises the tail-masking path.
    N2, C2, H2, W2 = 2, 4, 13, 13
    logits2 = jax.random.normal(k3, (N2, C2, H2, W2), dtype=jnp.float32)
    target2 = jax.random.randint(k4, (N2, H2, W2), 0, C2, dtype=jnp.int32)

    loss2 = jax.block_until_ready(focal_loss(logits2, target2, gamma=5.0))
    ref2 = _focal_loss_ref(logits2, target2, gamma=5.0)
    assert jnp.allclose(loss2, ref2, rtol=1e-4, atol=1e-6), (loss2, ref2)

    print("KERNEL_OK")
</pallas_src>

<mosaic_0001>
module attributes {stable_mosaic.version = 11 : i64} {
  func.func @_focal_loss_kernel(%arg0: i32, %arg1: i32, %arg2: memref<1x4x256xf32, #tpu.memory_space<vmem>>, %arg3: memref<1x1x256xi32, #tpu.memory_space<vmem>>, %arg4: memref<1x1x256xf32, #tpu.memory_space<vmem>>) attributes {dimension_semantics = [#tpu.dimension_semantics<parallel>, #tpu.dimension_semantics<arbitrary>], iteration_bounds = array<i64: 2, 1>, scalar_prefetch = 0 : i64, scratch_operands = 0 : i64, tpu.core_type = #tpu.core_type<tc>, window_params = [{transform_indices = @transform_0, window_bounds = array<i64: 1, 4, 256>}, {transform_indices = @transform_1, window_bounds = array<i64: 1, 1, 256>}, {transform_indices = @transform_2, window_bounds = array<i64: 1, 1, 256>}]} {
    %c0 = arith.constant 0 : index
    %c0_0 = arith.constant 0 : index
    %c0_1 = arith.constant 0 : index
    %0 = vector.load %arg2[%c0, %c0_0, %c0_1] : memref<1x4x256xf32, #tpu.memory_space<vmem>>, vector<1x4x256xf32>
    %c0_2 = arith.constant 0 : index
    %c0_3 = arith.constant 0 : index
    %c0_4 = arith.constant 0 : index
    %1 = vector.load %arg3[%c0_2, %c0_3, %c0_4] : memref<1x1x256xi32, #tpu.memory_space<vmem>>, vector<1x1x256xi32>
    %cst = arith.constant dense<0xFF800000> : vector<1x256xf32>
    %2 = vector.multi_reduction <maximumf>, %0, %cst [1] : vector<1x4x256xf32> to vector<1x256xf32>
    %3 = vector.shape_cast %2 : vector<1x256xf32> to vector<1x1x256xf32>
    %4 = vector.broadcast %3 : vector<1x1x256xf32> to vector<1x4x256xf32>
    %5 = arith.subf %0, %4 : vector<1x4x256xf32>
    %6 = math.exp %5 : vector<1x4x256xf32>
    %cst_5 = arith.constant dense<0.000000e+00> : vector<1x256xf32>
    %7 = vector.multi_reduction <add>, %6, %cst_5 [1] : vector<1x4x256xf32> to vector<1x256xf32>
    %8 = vector.shape_cast %7 : vector<1x256xf32> to vector<1x1x256xf32>
    %9 = math.log %8 : vector<1x1x256xf32>
    %10 = tpu.iota {dimensions = array<i32: 1>} : vector<1x4x256xi32>
    %11 = vector.broadcast %1 : vector<1x1x256xi32> to vector<1x4x256xi32>
    %12 = arith.cmpi eq, %10, %11 : vector<1x4x256xi32>
    %cst_6 = arith.constant 0.000000e+00 : f32
    %13 = vector.broadcast %cst_6 : f32 to vector<1x4x256xf32>
    %14 = arith.select %12, %0, %13 : vector<1x4x256xi1>, vector<1x4x256xf32>
    %cst_7 = arith.constant dense<0.000000e+00> : vector<1x256xf32>
    %15 = vector.multi_reduction <add>, %14, %cst_7 [1] : vector<1x4x256xf32> to vector<1x256xf32>
    %16 = vector.shape_cast %15 : vector<1x256xf32> to vector<1x1x256xf32>
    %17 = arith.subf %16, %3 : vector<1x1x256xf32>
    %18 = arith.subf %17, %9 : vector<1x1x256xf32>
    %19 = math.exp %18 : vector<1x1x256xf32>
    %cst_8 = arith.constant 1.000000e+00 : f32
    %20 = vector.broadcast %cst_8 : f32 to vector<1x1x256xf32>
    %21 = arith.subf %20, %19 : vector<1x1x256xf32>
    %22 = arith.mulf %21, %21 : vector<1x1x256xf32>
    %23 = arith.mulf %22, %22 : vector<1x1x256xf32>
    %24 = arith.mulf %21, %23 : vector<1x1x256xf32>
    %25 = arith.mulf %24, %18 : vector<1x1x256xf32>
    %cst_9 = arith.constant 0.000000e+00 : f32
    %26 = vector.broadcast %cst_9 : f32 to vector<1x1x256xf32>
    %27 = arith.subf %26, %25 : vector<1x1x256xf32>
    %c0_i32 = arith.constant 0 : i32
    %28 = arith.cmpi eq, %arg1, %c0_i32 : i32
    %29 = arith.extui %28 : i1 to i32
    %c0_i32_10 = arith.constant 0 : i32
    %30 = arith.cmpi ne, %29, %c0_i32_10 : i32
    scf.if %30 {
      %cst_17 = arith.constant 0.000000e+00 : f32
      %34 = vector.broadcast %cst_17 : f32 to vector<1x1x256xf32>
      %c0_18 = arith.constant 0 : index
      %c0_19 = arith.constant 0 : index
      %c0_20 = arith.constant 0 : index
      %35 = vector.load %arg4[%c0_18, %c0_19, %c0_20] : memref<1x1x256xf32, #tpu.memory_space<vmem>>, vector<1x1x256xf32>
      tpu.vector_store %arg4[%c0_18, %c0_19, %c0_20], %34 {strides = array<i32>} : memref<1x1x256xf32, #tpu.memory_space<vmem>>, vector<1x1x256xf32>,
    } else {
    }
    %c0_11 = arith.constant 0 : index
    %c0_12 = arith.constant 0 : index
    %c0_13 = arith.constant 0 : index
    %31 = vector.load %arg4[%c0_11, %c0_12, %c0_13] : memref<1x1x256xf32, #tpu.memory_space<vmem>>, vector<1x1x256xf32>
    %32 = arith.addf %31, %27 : vector<1x1x256xf32>
    %c0_14 = arith.constant 0 : index
    %c0_15 = arith.constant 0 : index
    %c0_16 = arith.constant 0 : index
    %33 = vector.load %arg4[%c0_14, %c0_15, %c0_16] : memref<1x1x256xf32, #tpu.memory_space<vmem>>, vector<1x1x256xf32>
    tpu.vector_store %arg4[%c0_14, %c0_15, %c0_16], %32 {strides = array<i32>} : memref<1x1x256xf32, #tpu.memory_space<vmem>>, vector<1x1x256xf32>,
    return
  }
  func.func @transform_0(%arg0: i32, %arg1: i32) -> (i32, i32, i32) {
    %c0_i32 = arith.constant 0 : i32
    %c0_i32_0 = arith.constant 0 : i32
    return %arg0, %c0_i32, %arg1 : i32, i32, i32
  }
  func.func @transform_1(%arg0: i32, %arg1: i32) -> (i32, i32, i32) {
    %c0_i32 = arith.constant 0 : i32
    %c0_i32_0 = arith.constant 0 : i32
    return %arg0, %c0_i32, %arg1 : i32, i32, i32
  }
  func.func @transform_2(%arg0: i32, %arg1: i32) -> (i32, i32, i32) {
    %c0_i32 = arith.constant 0 : i32
    %c0_i32_0 = arith.constant 0 : i32
    %c0_i32_1 = arith.constant 0 : i32
    return %arg0, %c0_i32, %c0_i32_0 : i32, i32, i32
  }
}

</mosaic_0001>

<llo_original>
// kernel: tpu_custom_call.1
$region0: #{tpu_custom_call.1}
  #allocation0 [shape = 'u32[]', space=smem, size = 0x4, offset = 0x4, fixed_abs, tag = 'smem constant byte address 0x4 - core index']
  #allocation1 [shape = 'u32[144,128]{1,0:T(1,128)}', space=vmem, size = 0x12000, scoped, tag = 'internal scratch']
  %s0 = inlined_call_operand.hbm [shape: f32[2,4,256], index: 0, kind: input, shape index: {}]
  %s1 = inlined_call_operand.hbm [shape: s32[2,1,256], index: 1, kind: input, shape index: {}]
  %s2 = inlined_call_operand.hbm [shape: f32[2,1,256], index: 2, kind: output, shape index: {}]
  %s3 = sld [smem:[#allocation0]]
  $region53: #{tpu_custom_call.1} parent=0
    _
  %s5 = ssub.s32 1, %s3
  %s6 = scalar_select 0, %s5, %s3
  $region1: #{tpu_custom_call.1} parent=0
    #allocation2 [shape = 'u8[8192]{0}', space=vmem, size = 0x2000, scoped, tag = 'input window, operand 0']
    #allocation3 [shape = 's32[2]{0}', space=sflag, size = 0x8, scoped, tag = 'scoped memory for tpu_custom_call.1']
    #allocation4 [shape = 's32[2]{0}', space=sflag, size = 0x8, scoped, tag = 'scoped memory for tpu_custom_call.1']
    #allocation5 [shape = 'u8[2048]{0}', space=vmem, size = 0x800, scoped, tag = 'input window, operand 1']
    #allocation6 [shape = 's32[2]{0}', space=sflag, size = 0x8, scoped, tag = 'scoped memory for tpu_custom_call.1']
    #allocation7 [shape = 'u8[2048]{0}', space=vmem, size = 0x800, scoped, tag = 'output window, operand 0']
    %7 = vsyncpa [#allocation3], 0
    %s8 = scalar_lea.sflag [#allocation3], 1
    %9 = vsyncpa %s8, 0
    %10 = vsyncpa [#allocation6], 0
    %s11 = scalar_lea.sflag [#allocation6], 1
    %12 = vsyncpa %s11, 0
    %13 = vsyncpa [#allocation4], 0
    %s14 = scalar_lea.sflag [#allocation4], 1
    %15 = vsyncpa %s14, 0
    loop: start=0, step=1, limit=4
    $region2: #{tpu_custom_call.1} parent=1 // loop_pre_header
      _
    $region3: #{tpu_custom_call.1} parent=1 // loop_header
      %s17 = sphi 0, %s21
      %p18 = scmp.ge.s32.totalorder %s17, 4
      %s24 = sphi 0, %s36
      %s25 = sphi 0, %s32
      %s26 = sphi 0, %s24
      %s27 = sphi 0, %s25
      %s28 = sphi 0, %s26
      %s29 = sphi 0, %s27
      %s41 = sphi 0, %s43
      %s44 = sphi 0, %s41
      %s45 = sphi 0, %s44
      %s61 = sphi 0, %s45
      %s69 = sphi 0, %s71
      %s72 = sphi 0, %s69
      %s73 = sphi 0, %s72
      %s89 = sphi 0, %s73
      %s95 = sphi 0, %s97
      %s98 = sphi 0, %s95
      %s99 = sphi 0, %s98
      %s115 = sphi 0, %s99
    $region4: #{tpu_custom_call.1} parent=1 // loop_header_branch
      %20 = sbr.rel (%p18) target = $region8
    $region5: #{tpu_custom_call.1} parent=1 // loop_body
      %s22 = ssub.s32 %s17, 1
      %s23 = ssub.s32 %s17, 2
      %s30 = sadd.s32 1, %s25
      %p31 = scmp.ge.s32.totalorder %s30, 1
      %s32 = scalar_select %p31, 0, %s30
      %s33 = sadd.s32 1, %s24
      %s34 = scalar_select %p31, %s33, %s24
      %p35 = scmp.ge.s32.totalorder %s34, 2
      %s36 = scalar_select %p35, 0, %s34
      %s37 = ssub.s32 %s24, %s36
      %s38 = ssub.s32 %s25, %s32
      %s39 = sor.u32 %s37, %s38
      %p40 = scmp.eq.s32.totalorder %s39, 0
      %s42 = sadd.s32 %s41, 1
      %s43 = scalar_select %p40, %s41, %s42
      %p46 = pneg %p40
      %p47 = scmp.eq.s32.totalorder %s17, 1
      %p48 = por %p46, %p47
      %p49 = scmp.ne.s32.totalorder %s41, %s44
      %p50 = scmp.eq.s32.totalorder %s17, 0
      %p51 = por %p49, %p50
      %p52 = scmp.ne.s32.totalorder %s41, %s44
      %p53 = scmp.eq.s32.totalorder %s22, 1
      %p54 = por %p52, %p53
      %p55 = scmp.ne.s32.totalorder %s44, %s45
      %p56 = scmp.eq.s32.totalorder %s22, 0
      %p57 = por %p55, %p56
      %p58 = scmp.ne.s32.totalorder %s44, %s45
      %p59 = scmp.eq.s32.totalorder %s23, 1
      %p60 = por %p58, %p59
      %p62 = scmp.ne.s32.totalorder %s45, %s61
      %p63 = scmp.eq.s32.totalorder %s23, 0
      %p64 = por %p62, %p63
      %s65 = ssub.s32 %s24, %s36
      %s66 = ssub.s32 %s25, %s32
      %s67 = sor.u32 %s65, %s66
      %p68 = scmp.eq.s32.totalorder %s67, 0
      %s70 = sadd.s32 %s69, 1
      %s71 = scalar_select %p68, %s69, %s70
      %p74 = pneg %p68
      %p75 = scmp.eq.s32.totalorder %s17, 1
      %p76 = por %p74, %p75
      %p77 = scmp.ne.s32.totalorder %s69, %s72
      %p78 = scmp.eq.s32.totalorder %s17, 0
      %p79 = por %p77, %p78
      %p80 = scmp.ne.s32.totalorder %s69, %s72
      %p81 = scmp.eq.s32.totalorder %s22, 1
      %p82 = por %p80, %p81
      %p83 = scmp.ne.s32.totalorder %s72, %s73
      %p84 = scmp.eq.s32.totalorder %s22, 0
      %p85 = por %p83, %p84
      %p86 = scmp.ne.s32.totalorder %s72, %s73
      %p87 = scmp.eq.s32.totalorder %s23, 1
      %p88 = por %p86, %p87
      %p90 = scmp.ne.s32.totalorder %s73, %s89
      %p91 = scmp.eq.s32.totalorder %s23, 0
      %p92 = por %p90, %p91
      %s93 = ssub.s32 %s24, %s36
      %p94 = scmp.eq.s32.totalorder %s93, 0
      %s96 = sadd.s32 %s95, 1
      %s97 = scalar_select %p94, %s95, %s96
      %p100 = pneg %p94
      %p101 = scmp.eq.s32.totalorder %s17, 1
      %p102 = por %p100, %p101
      %p103 = scmp.ne.s32.totalorder %s95, %s98
      %p104 = scmp.eq.s32.totalorder %s17, 0
      %p105 = por %p103, %p104
      %p106 = scmp.ne.s32.totalorder %s95, %s98
      %p107 = scmp.eq.s32.totalorder %s22, 1
      %p108 = por %p106, %p107
      %p109 = scmp.ne.s32.totalorder %s98, %s99
      %p110 = scmp.eq.s32.totalorder %s22, 0
      %p111 = por %p109, %p110
      %p112 = scmp.ne.s32.totalorder %s98, %s99
      %p113 = scmp.eq.s32.totalorder %s23, 1
      %p114 = por %p112, %p113
      %p116 = scmp.ne.s32.totalorder %s99, %s115
      %p117 = scmp.eq.s32.totalorder %s23, 0
      %p118 = por %p116, %p117
      %p119 = scmp.le.s32.totalorder 1, %s17
      %p120 = scmp.lt.s32.totalorder %s17, 3
      %p121 = pnand %p119, %p120
      %p122 = pneg %p121
      // Predicated region
      $region9: #{tpu_custom_call.1} parent=5 // pred_check
        _
      $region10: #{tpu_custom_call.1} parent=5 // pred_check_branch
        %124 = sbr.rel (%p121) target = $region12
      $region11: #{tpu_custom_call.1} parent=5 // pred_region
        %s125 = ssub.s32 %s17, 1
      $region12: #{tpu_custom_call.1} parent=5 // pred_fallthru
        _
      %p126 = scmp.lt.s32.totalorder %s17, 2
      // Predicated region
      $region13: #{tpu_custom_call.1} parent=5 // pred_check
        %p127 = pneg %p126
      $region14: #{tpu_custom_call.1} parent=5 // pred_check_branch
        %129 = sbr.rel (%p127) target = $region16
      $region15: #{tpu_custom_call.1} parent=5 // pred_region
        // Predicated region
        $region17: #{tpu_custom_call.1} parent=15 // pred_check
          %p130 = pneg %p51
        $region18: #{tpu_custom_call.1} parent=15 // pred_check_branch
          %132 = sbr.rel (%p130) target = $region20
        $region19: #{tpu_custom_call.1} parent=15 // pred_region
          %s133 = sand.u32 %s41, 1
          %s134 = scalar_lea.sflag [#allocation3], %s133
          %s135 = sand.u32 %s41, 1
          %s136 = smul.addr %s135, 8
          %s137 = scalar_lea.vmem [#allocation2], %s136
          %s138 = smul.u32 2, %s25
          %s140 = ssub.s32 128, 128
          %141 = vsyncadd %s134, %s140
          %s142 = smul.addr %s24, 2
          %s143 = sadd.s32 %s138, %s142
          %s144 = smul.addr %s143, 64
          %s145 = scalar_lea.hbm %s0, %s144
          %s147 = sshll.u32 %s137, 4
          %s148 = int_to_ptr.vmem [resolvable:$true] %s147
          %150 = dma.hbm_to_vmem [thread:$0]  %s145, 128, %s148, %s134
        $region20: #{tpu_custom_call.1} parent=15 // pred_fallthru
          _
        // Predicated region
        $region21: #{tpu_custom_call.1} parent=15 // pred_check
          %p151 = pneg %p79
        $region22: #{tpu_custom_call.1} parent=15 // pred_check_branch
          %153 = sbr.rel (%p151) target = $region24
        $region23: #{tpu_custom_call.1} parent=15 // pred_region
          %s154 = sand.u32 %s69, 1
          %s155 = scalar_lea.sflag [#allocation6], %s154
          %s156 = sand.u32 %s69, 1
          %s157 = smul.addr %s156, 2
          %s158 = scalar_lea.vmem [#allocation5], %s157
          %s159 = smul.u32 2, %s25
          %s161 = ssub.s32 32, 32
          %162 = vsyncadd %s155, %s161
          %s163 = smul.addr %s24, 2
          %s164 = sadd.s32 %s159, %s163
          %s165 = smul.addr %s164, 16
          %s166 = scalar_lea.hbm %s1, %s165
          %s168 = sshll.u32 %s158, 4
          %s169 = int_to_ptr.vmem [resolvable:$true] %s168
          %171 = dma.hbm_to_vmem [thread:$0]  %s166, 32, %s169, %s155
        $region24: #{tpu_custom_call.1} parent=15 // pred_fallthru
          _
      $region16: #{tpu_custom_call.1} parent=5 // pred_fallthru
        _
      %p172 = scmp.le.s32.totalorder 1, %s17
      %p173 = scmp.lt.s32.totalorder %s17, 3
      %p174 = pnand %p172, %p173
      %p175 = pneg %p174
      // Predicated region
      $region25: #{tpu_custom_call.1} parent=5 // pred_check
        _
      $region26: #{tpu_custom_call.1} parent=5 // pred_check_branch
        %177 = sbr.rel (%p174) target = $region28
      $region27: #{tpu_custom_call.1} parent=5 // pred_region
        %s178 = ssub.s32 %s17, 1
        %s179 = sand.u32 %s44, 1
        %s180 = scalar_lea.sflag [#allocation3], %s179
        %s181 = sand.u32 %s44, 1
        %s182 = smul.addr %s181, 8
        %s183 = scalar_lea.vmem [#allocation2], %s182
        // Predicated region
        $region29: #{tpu_custom_call.1} parent=27 // pred_check
          %p184 = pneg %p57
        $region30: #{tpu_custom_call.1} parent=27 // pred_check_branch
          %186 = sbr.rel (%p184) target = $region32
        $region31: #{tpu_custom_call.1} parent=27 // pred_region
          %187 = dma.done %s180, 128
        $region32: #{tpu_custom_call.1} parent=27 // pred_fallthru
          _
        %s188 = sand.u32 %s72, 1
        %s189 = scalar_lea.sflag [#allocation6], %s188
        %s190 = sand.u32 %s72, 1
        %s191 = smul.addr %s190, 2
        %s192 = scalar_lea.vmem [#allocation5], %s191
        // Predicated region
        $region33: #{tpu_custom_call.1} parent=27 // pred_check
          %p193 = pneg %p85
        $region34: #{tpu_custom_call.1} parent=27 // pred_check_branch
          %195 = sbr.rel (%p193) target = $region36
        $region35: #{tpu_custom_call.1} parent=27 // pred_region
          %196 = dma.done %s189, 32
        $region36: #{tpu_custom_call.1} parent=27 // pred_fallthru
          _
        %s197 = sand.u32 %s44, 1
        %s198 = scalar_lea.sflag [#allocation3], %s197
        %s199 = sand.u32 %s44, 1
        %s200 = smul.addr %s199, 8
        %s201 = scalar_lea.vmem [#allocation2], %s200
        %p202 = pneg %p57
        %p203 = pneg %p54
        %s204 = sand.u32 %s72, 1
        %s205 = scalar_lea.sflag [#allocation6], %s204
        %s206 = sand.u32 %s72, 1
        %s207 = smul.addr %s206, 2
        %s208 = scalar_lea.vmem [#allocation5], %s207
        %p209 = pneg %p85
        %p210 = pneg %p82
        %p211 = pneg %p111
        %p212 = pneg %p108
        %s213 = sand.u32 %s98, 1
        %s214 = scalar_lea.sflag [#allocation4], %s213
        %s215 = sand.u32 %s98, 1
        %s216 = smul.addr %s215, 2
        %s217 = scalar_lea.vmem [#allocation7], %s216
        %s218 = smul.u32 2, %s27
        %s219 = smul.u32 2, %s27
        %v220 = vld [vmem:[%s183] sm:$0xff]
        %v221 = vld [vmem:[%s192] sm:$0x3]
        %v223 = vcombine.high %v220, %v220
        %vm225 = vcmask 1043456
        %v226 = vsel %vm225, %v220, -inf
        %v227 = vrot.slane %v226, 4
        %v228 = vmax.f32 %v226, %v227
        %v229 = vrot.slane %v228, 2
        %v230 = vmax.f32 %v228, %v229
        %v231 = vrot.slane %v230, 1
        %v232 = vmax.f32 %v230, %v231
        %v233 = vsel %vm225, %v223, -inf
        %v234 = vrot.slane %v233, 4
        %v235 = vmax.f32 %v233, %v234
        %v236 = vrot.slane %v235, 2
        %v237 = vmax.f32 %v235, %v236
        %v238 = vrot.slane %v237, 1
        %v239 = vmax.f32 %v237, %v238
        %v242 = vcombine.low %v232, %v239
        %v244 = vsub.f32 %v220, %v242
        %v245 = vmul.f32 %v244, 1.442695
        %v246 = vpow.pop %v245
        %v248 = vcombine.high %v246, %v246
        %v250 = vsel %vm225, %v246, 0.0
        %v251 = vrot.slane %v250, 4
        %v252 = vadd.f32 %v250, %v251
        %v253 = vrot.slane %v252, 2
        %v254 = vadd.f32 %v252, %v253
        %v255 = vrot.slane %v254, 1
        %v256 = vadd.f32 %v254, %v255
        %v257 = vsel %vm225, %v248, 0.0
        %v258 = vrot.slane %v257, 4
        %v259 = vadd.f32 %v257, %v258
        %v260 = vrot.slane %v259, 2
        %v261 = vadd.f32 %v259, %v260
        %v262 = vrot.slane %v261, 1
        %v263 = vadd.f32 %v261, %v262
        %v264 = vlog2.pop %v256
        %v265 = vmul.f32 %v264, 0.6931472
        %v266 = vlog2.pop %v263
        %v267 = vmul.f32 %v266, 0.6931472
        %v268 = vlaneseq
        %v269 = vshrl.u32 %v268, 7
        %v270 = vlaneseq
        %v271 = vshrl.u32 %v270, 7
        %v272 = vsub.s32 0, %v271
        %v273 = vrot.slane %v221, %v272
        %v274 = vlaneseq
        %v275 = vshrl.u32 %v274, 7
        %v276 = vsub.s32 1, %v275
        %v277 = vrot.slane %v221, %v276
        %vm278 = vcmp.eq.s32.totalorder %v269, %v273
        %vm279 = vcmp.eq.s32.totalorder %v269, %v277
        %v280 = vsel %vm278, %v220, 0.0
        %v281 = vsel %vm279, %v223, 0.0
        %v282 = vsel %vm225, %v280, 0.0
        %v283 = vrot.slane %v282, 4
        %v284 = vadd.f32 %v282, %v283
        %v285 = vrot.slane %v284, 2
        %v286 = vadd.f32 %v284, %v285
        %v287 = vrot.slane %v286, 1
        %v288 = vadd.f32 %v286, %v287
        %v289 = vsel %vm225, %v281, 0.0
        %v290 = vrot.slane %v289, 4
        %v291 = vadd.f32 %v289, %v290
        %v292 = vrot.slane %v291, 2
        %v293 = vadd.f32 %v291, %v292
        %v294 = vrot.slane %v293, 1
        %v295 = vadd.f32 %v293, %v294
        %v296 = vsub.f32 %v288, %v232
        %v297 = vsub.f32 %v295, %v239
        %v298 = vsub.f32 %v296, %v265
        %v299 = vsub.f32 %v297, %v267
        %v300 = vmul.f32 %v298, 1.442695
        %v301 = vpow.pop %v300
        %v302 = vmul.f32 %v299, 1.442695
        %v303 = vpow.pop %v302
        %v304 = vsub.f32 1.0, %v301
        %v305 = vsub.f32 1.0, %v303
        %v306 = vmul.f32 %v304, %v304
        %v307 = vmul.f32 %v305, %v305
        %v308 = vmul.f32 %v306, %v306
        %v309 = vmul.f32 %v307, %v307
        %v310 = vmul.f32 %v304, %v308
        %v311 = vmul.f32 %v305, %v309
        %v312 = vmul.f32 %v310, %v298
        %v313 = vmul.f32 %v311, %v299
        %v314 = vsub.f32 0.0, %v312
        %v315 = vsub.f32 0.0, %v313
        %p316 = scmp.eq.s32.totalorder %s27, 0
        // Predicated region
        $region37: #{tpu_custom_call.1} parent=27 // pred_check
          %p317 = pneg %p316
        $region38: #{tpu_custom_call.1} parent=27 // pred_check_branch
          %319 = sbr.rel (%p317) target = $region40
        $region39: #{tpu_custom_call.1} parent=27 // pred_region
          %v320 = vlaneseq
          %vm321 = vcmp.ge.s32.totalorder %v320, 0
          %vm322 = vcmp.lt.s32.totalorder %v320, 256
          %vm323 = vmand %vm321, %vm322
          %324 = vst.msk [vmem:[%s217] sm:$0x3] %vm323, 0.0
        $region40: #{tpu_custom_call.1} parent=27 // pred_fallthru
          _
        %v325 = vld [vmem:[%s217] sm:$0x3]
        %v328 = vcombine.low %v314, %v315
        %v330 = vunpack.c.l.s4 1966171168
        %v331 = vunpack.c.0.s8 %v330
        %v332 = vlaneseq
        %v333 = vshrl.u32 %v332, 7
        %v334 = vsub.s32 %v331, %v333
        %v335 = vrot.slane %v328, %v334
        %v337 = vunpack.c.l.s4 1966171168
        %v338 = vunpack.c.0.s8 %v337
        %v339 = vlaneseq
        %v340 = vshrl.u32 %v339, 7
        %v341 = vsub.s32 %v338, %v340
        %v342 = vrot.slane %v335, %v341
        %v344 = vadd.f32 %v325, %v342
        %v345 = vlaneseq
        %vm346 = vcmp.ge.s32.totalorder %v345, 0
        %vm347 = vcmp.lt.s32.totalorder %v345, 256
        %vm348 = vmand %vm346, %vm347
        %349 = vst.msk [vmem:[%s217] sm:$0x3] %vm348, %v344
        %s350 = sand.u32 %s98, 1
        %s351 = scalar_lea.sflag [#allocation4], %s350
        %s352 = sand.u32 %s98, 1
        %s353 = smul.addr %s352, 2
        %s354 = scalar_lea.vmem [#allocation7], %s353
        // Predicated region
        $region41: #{tpu_custom_call.1} parent=27 // pred_check
          %p355 = pneg %p108
        $region42: #{tpu_custom_call.1} parent=27 // pred_check_branch
          %357 = sbr.rel (%p355) target = $region44
        $region43: #{tpu_custom_call.1} parent=27 // pred_region
          %s359 = ssub.s32 32, 32
          %360 = vsyncadd %s351, %s359
          %s361 = smul.addr %s26, 2
          %s362 = smul.addr %s361, 16
          %s363 = scalar_lea.hbm %s2, %s362
          %s365 = sshll.u32 %s354, 4
          %s366 = int_to_ptr.vmem [resolvable:$true] %s365
          %368 = dma.vmem_to_hbm [thread:$0]  %s366, 32, %s363, %s351
        $region44: #{tpu_custom_call.1} parent=27 // pred_fallthru
          _
      $region28: #{tpu_custom_call.1} parent=5 // pred_fallthru
        _
      %p369 = scmp.le.s32.totalorder 2, %s17
      // Predicated region
      $region45: #{tpu_custom_call.1} parent=5 // pred_check
        %p370 = pneg %p369
      $region46: #{tpu_custom_call.1} parent=5 // pred_check_branch
        %372 = sbr.rel (%p370) target = $region48
      $region47: #{tpu_custom_call.1} parent=5 // pred_region
        %s373 = ssub.s32 %s17, 2
        // Predicated region
        $region49: #{tpu_custom_call.1} parent=47 // pred_check
          %p374 = pneg %p114
        $region50: #{tpu_custom_call.1} parent=47 // pred_check_branch
          %376 = sbr.rel (%p374) target = $region52
        $region51: #{tpu_custom_call.1} parent=47 // pred_region
          %s377 = sand.u32 %s99, 1
          %s378 = scalar_lea.sflag [#allocation4], %s377
          %s379 = sand.u32 %s99, 1
          %s380 = smul.addr %s379, 2
          %s381 = scalar_lea.vmem [#allocation7], %s380
          %382 = dma.done %s378, 32
        $region52: #{tpu_custom_call.1} parent=47 // pred_fallthru
          _
      $region48: #{tpu_custom_call.1} parent=5 // pred_fallthru
        _
    $region6: #{tpu_custom_call.1} parent=1 // loop_footer
      %s21 = sadd.s32 1, %s17
    $region7: #{tpu_custom_call.1} parent=1 // loop_footer_branch
      %16 = sbr.rel target = $region3
    $region8: #{tpu_custom_call.1} parent=1 // loop_exit
      _
    %383 = vsyncpa [#allocation3], 1
    %s384 = scalar_lea.sflag [#allocation3], 1
    %385 = vsyncpa %s384, 1
    %386 = vsyncpa [#allocation6], 1
    %s387 = scalar_lea.sflag [#allocation6], 1
    %388 = vsyncpa %s387, 1
    %389 = vsyncpa [#allocation4], 1
    %s390 = scalar_lea.sflag [#allocation4], 1
    %391 = vsyncpa %s390, 1

</llo_original>
